<compile_context>
chip_gen: v7x
topology: tpu7x:2x2x1
jax: 0.10.0
libtpu: 0.0.40
codegen_flags: <defaults>
</compile_context>

<pallas_src>
import jax
import jax.numpy as jnp
from jax.experimental import pallas as pl
from jax.experimental.pallas import tpu as pltpu


Z_DIM_INV = 32
Z_DIM_SP = 32
IN_DIM = Z_DIM_INV + Z_DIM_SP      # 64
HIDDEN = 128
NUM_CLASSES = 7
OUT_PAD = 8                        # logits padded 7 -> 8 (tiny writeback stream)


def _round_up(x, m):
    return ((x + m - 1) // m) * m


def _mlp_kernel(zi_ref, zs_ref, w1a_ref, w1b_ref, b1_ref, w2_ref, b2_ref, o_ref):
    cdt = w1a_ref.dtype
    # Layer 1: two K=32 matmuls (one per input stream) into a shared f32
    # accumulator — the concat never materializes, cast happens in-kernel.
    h = jnp.dot(zi_ref[...].astype(cdt), w1a_ref[...],
                preferred_element_type=jnp.float32)
    h = h + jnp.dot(zs_ref[...].astype(cdt), w1b_ref[...],
                    preferred_element_type=jnp.float32)
    h = jnp.maximum(h + b1_ref[...], 0.0)            # bias + ReLU in f32 (VPU)
    # Layer 2: N=8 (zero-padded from 7), f32 accumulation + f32 bias add.
    logits = jnp.dot(h.astype(cdt), w2_ref[...],
                     preferred_element_type=jnp.float32)
    o_ref[...] = (logits + b2_ref[...]).astype(o_ref.dtype)


def init_params(key):
    """PyTorch nn.Linear-style init (U[-1/sqrt(fan_in), +1/sqrt(fan_in)])."""
    k1, k2, k3, k4 = jax.random.split(key, 4)
    bound1 = 1.0 / jnp.sqrt(IN_DIM)
    bound2 = 1.0 / jnp.sqrt(HIDDEN)
    w1 = jax.random.uniform(k1, (IN_DIM, HIDDEN), jnp.float32, -bound1, bound1)
    b1 = jax.random.uniform(k2, (1, HIDDEN), jnp.float32, -bound1, bound1)
    w2 = jax.random.uniform(k3, (HIDDEN, NUM_CLASSES), jnp.float32, -bound2, bound2)
    b2 = jax.random.uniform(k4, (1, NUM_CLASSES), jnp.float32, -bound2, bound2)
    return (w1, b1, w2, b2)


def prepare_params(params, compute_dtype=jnp.bfloat16):
    """One-time parameter prep (NOT per-call): split W1 per input stream,
    zero-pad W2/b2 from 7 -> 8 columns, cast weights to the compute dtype."""
    w1, b1, w2, b2 = params
    w1a = w1[:Z_DIM_INV, :].astype(compute_dtype)
    w1b = w1[Z_DIM_INV:, :].astype(compute_dtype)
    w2p = (jnp.zeros((HIDDEN, OUT_PAD), jnp.float32)
           .at[:, :NUM_CLASSES].set(w2).astype(compute_dtype))
    b1p = b1.reshape(1, HIDDEN).astype(jnp.float32)
    b2p = (jnp.zeros((1, OUT_PAD), jnp.float32)
           .at[:, :NUM_CLASSES].set(b2.reshape(1, NUM_CLASSES)))
    return (w1a, w1b, w2p, b1p, b2p)


def class_label_classifier(z_inv, z_sp, prepared_params, *, tile_b=2048):
    """Forward pass. z_inv: (B, 32), z_sp: (B, 32) -> logits (B, 7) in f32."""
    w1a, w1b, w2p, b1p, b2p = prepared_params
    B = z_inv.shape[0]

    # Batch tile: big (amortize per-grid-step overhead) but capped so there are
    # >= 2 grid steps when B allows (keeps both v7x TensorCores busy). tb is a
    # sublane multiple; a partial last block is handled by Pallas (rows are
    # independent, boundary writeback is masked) — no jnp.pad copy.
    tb = min(max(tile_b, 8), _round_up(pl.cdiv(B, 2), 8))
    grid_b = pl.cdiv(B, tb)

    out = pl.pallas_call(
        _mlp_kernel,
        out_shape=jax.ShapeDtypeStruct((B, OUT_PAD), jnp.float32),
        grid_spec=pltpu.PrefetchScalarGridSpec(
            num_scalar_prefetch=0,
            grid=(grid_b,),
            in_specs=[
                pl.BlockSpec((tb, Z_DIM_INV), lambda i: (i, 0)),       # z_inv tile
                pl.BlockSpec((tb, Z_DIM_SP), lambda i: (i, 0)),        # z_sp tile
                pl.BlockSpec((Z_DIM_INV, HIDDEN), lambda i: (0, 0)),   # W1[:32]  (resident)
                pl.BlockSpec((Z_DIM_SP, HIDDEN), lambda i: (0, 0)),    # W1[32:]  (resident)
                pl.BlockSpec((1, HIDDEN), lambda i: (0, 0)),           # b1       (resident)
                pl.BlockSpec((HIDDEN, OUT_PAD), lambda i: (0, 0)),     # W2 pad   (resident)
                pl.BlockSpec((1, OUT_PAD), lambda i: (0, 0)),          # b2 pad   (resident)
            ],
            out_specs=pl.BlockSpec((tb, OUT_PAD), lambda i: (i, 0)),
        ),
        compiler_params=pltpu.CompilerParams(
            dimension_semantics=("parallel",),
        ),
    )(z_inv, z_sp, w1a, w1b, b1p, w2p, b2p)

    return out[:, :NUM_CLASSES]


def reference_forward(z_inv, z_sp, params, compute_dtype=jnp.bfloat16):
    """Pure-JAX reference with the same bf16 operand rounding (f32 accumulation)."""
    w1, b1, w2, b2 = params
    z = jnp.concatenate([z_inv, z_sp], axis=1)
    z = z.astype(compute_dtype).astype(jnp.float32)
    w1f = w1.astype(compute_dtype).astype(jnp.float32)
    w2f = w2.astype(compute_dtype).astype(jnp.float32)
    h = jnp.maximum(z @ w1f + b1, 0.0)
    h = h.astype(compute_dtype).astype(jnp.float32)
    return h @ w2f + b2


if __name__ == "__main__":
    key = jax.random.PRNGKey(0)
    kp, ki, ks = jax.random.split(key, 3)

    raw_params = init_params(kp)
    params = prepare_params(raw_params)        # one-time prep (hoisted out of forward)

    # Case 1: small batch (single tile).
    B = 8
    z_inv = jax.random.normal(ki, (B, Z_DIM_INV), jnp.float32)
    z_sp = jax.random.normal(ks, (B, Z_DIM_SP), jnp.float32)

    logits = class_label_classifier(z_inv, z_sp, params)
    jax.block_until_ready(logits)
    ref = reference_forward(z_inv, z_sp, raw_params)
    assert logits.shape == (B, NUM_CLASSES)
    assert jnp.allclose(logits, ref, atol=2e-2, rtol=2e-2), "mismatch vs reference (B=8)"

    # Case 2: B not divisible by tile -> exercises grid > 1 + partial last block.
    B2 = 24
    z_inv2 = jax.random.normal(jax.random.PRNGKey(1), (B2, Z_DIM_INV), jnp.float32)
    z_sp2 = jax.random.normal(jax.random.PRNGKey(2), (B2, Z_DIM_SP), jnp.float32)
    logits2 = class_label_classifier(z_inv2, z_sp2, params, tile_b=16)
    jax.block_until_ready(logits2)
    ref2 = reference_forward(z_inv2, z_sp2, raw_params)
    assert logits2.shape == (B2, NUM_CLASSES)
    assert jnp.allclose(logits2, ref2, atol=2e-2, rtol=2e-2), "mismatch vs reference (B=24)"

    print("KERNEL_OK")
</pallas_src>

<mosaic_0001>
module attributes {stable_mosaic.version = 11 : i64} {
  func.func @_mlp_kernel(%arg0: i32, %arg1: memref<8x32xf32, #tpu.memory_space<vmem>>, %arg2: memref<8x32xf32, #tpu.memory_space<vmem>>, %arg3: memref<32x128xbf16, #tpu.memory_space<vmem>>, %arg4: memref<32x128xbf16, #tpu.memory_space<vmem>>, %arg5: memref<1x128xf32, #tpu.memory_space<vmem>>, %arg6: memref<128x8xbf16, #tpu.memory_space<vmem>>, %arg7: memref<1x8xf32, #tpu.memory_space<vmem>>, %arg8: memref<8x8xf32, #tpu.memory_space<vmem>>) attributes {dimension_semantics = [#tpu.dimension_semantics<parallel>], iteration_bounds = array<i64: 1>, scalar_prefetch = 0 : i64, scratch_operands = 0 : i64, tpu.core_type = #tpu.core_type<tc>, window_params = [{transform_indices = @transform_0, window_bounds = array<i64: 8, 32>}, {transform_indices = @transform_1, window_bounds = array<i64: 8, 32>}, {pipeline_mode = #tpu.pipeline_mode<synchronous>, transform_indices = @transform_2, window_bounds = array<i64: 32, 128>}, {pipeline_mode = #tpu.pipeline_mode<synchronous>, transform_indices = @transform_3, window_bounds = array<i64: 32, 128>}, {pipeline_mode = #tpu.pipeline_mode<synchronous>, transform_indices = @transform_4, window_bounds = array<i64: 1, 128>}, {pipeline_mode = #tpu.pipeline_mode<synchronous>, transform_indices = @transform_5, window_bounds = array<i64: 128, 8>}, {pipeline_mode = #tpu.pipeline_mode<synchronous>, transform_indices = @transform_6, window_bounds = array<i64: 1, 8>}, {transform_indices = @transform_7, window_bounds = array<i64: 8, 8>}]} {
    %c0 = arith.constant 0 : index
    %c0_0 = arith.constant 0 : index
    %0 = vector.load %arg1[%c0, %c0_0] : memref<8x32xf32, #tpu.memory_space<vmem>>, vector<8x32xf32>
    %1 = arith.truncf %0 : vector<8x32xf32> to vector<8x32xbf16>
    %c0_1 = arith.constant 0 : index
    %c0_2 = arith.constant 0 : index
    %2 = vector.load %arg3[%c0_1, %c0_2] : memref<32x128xbf16, #tpu.memory_space<vmem>>, vector<32x128xbf16>
    %cst = arith.constant dense<0.000000e+00> : vector<8x128xf32>
    %3 = tpu.matmul %1, %2, %cst {dimension_numbers = #tpu.dot_dimension_numbers<[1], [0], [0], [1], [0, 0, 1, 1], [], []>} : vector<8x32xbf16>, vector<32x128xbf16>, vector<8x128xf32> -> vector<8x128xf32>
    %c0_3 = arith.constant 0 : index
    %c0_4 = arith.constant 0 : index
    %4 = vector.load %arg2[%c0_3, %c0_4] : memref<8x32xf32, #tpu.memory_space<vmem>>, vector<8x32xf32>
    %5 = arith.truncf %4 : vector<8x32xf32> to vector<8x32xbf16>
    %c0_5 = arith.constant 0 : index
    %c0_6 = arith.constant 0 : index
    %6 = vector.load %arg4[%c0_5, %c0_6] : memref<32x128xbf16, #tpu.memory_space<vmem>>, vector<32x128xbf16>
    %cst_7 = arith.constant dense<0.000000e+00> : vector<8x128xf32>
    %7 = tpu.matmul %5, %6, %cst_7 {dimension_numbers = #tpu.dot_dimension_numbers<[1], [0], [0], [1], [0, 0, 1, 1], [], []>} : vector<8x32xbf16>, vector<32x128xbf16>, vector<8x128xf32> -> vector<8x128xf32>
    %8 = arith.addf %3, %7 : vector<8x128xf32>
    %c0_8 = arith.constant 0 : index
    %c0_9 = arith.constant 0 : index
    %9 = vector.load %arg5[%c0_8, %c0_9] : memref<1x128xf32, #tpu.memory_space<vmem>>, vector<1x128xf32>
    %10 = vector.broadcast %9 : vector<1x128xf32> to vector<8x128xf32>
    %11 = arith.addf %8, %10 : vector<8x128xf32>
    %cst_10 = arith.constant 0.000000e+00 : f32
    %12 = vector.broadcast %cst_10 : f32 to vector<8x128xf32>
    %13 = arith.maximumf %11, %12 : vector<8x128xf32>
    %14 = arith.truncf %13 : vector<8x128xf32> to vector<8x128xbf16>
    %c0_11 = arith.constant 0 : index
    %c0_12 = arith.constant 0 : index
    %15 = vector.load %arg6[%c0_11, %c0_12] : memref<128x8xbf16, #tpu.memory_space<vmem>>, vector<128x8xbf16>
    %cst_13 = arith.constant dense<0.000000e+00> : vector<8x8xf32>
    %16 = tpu.matmul %14, %15, %cst_13 {dimension_numbers = #tpu.dot_dimension_numbers<[1], [0], [0], [1], [0, 0, 1, 1], [], []>} : vector<8x128xbf16>, vector<128x8xbf16>, vector<8x8xf32> -> vector<8x8xf32>
    %c0_14 = arith.constant 0 : index
    %c0_15 = arith.constant 0 : index
    %17 = vector.load %arg7[%c0_14, %c0_15] : memref<1x8xf32, #tpu.memory_space<vmem>>, vector<1x8xf32>
    %18 = vector.broadcast %17 : vector<1x8xf32> to vector<8x8xf32>
    %19 = arith.addf %16, %18 : vector<8x8xf32>
    %c0_16 = arith.constant 0 : index
    %c0_17 = arith.constant 0 : index
    %20 = vector.load %arg8[%c0_16, %c0_17] : memref<8x8xf32, #tpu.memory_space<vmem>>, vector<8x8xf32>
    tpu.vector_store %arg8[%c0_16, %c0_17], %19 {strides = array<i32>} : memref<8x8xf32, #tpu.memory_space<vmem>>, vector<8x8xf32>,
    return
  }
  func.func @transform_0(%arg0: i32) -> (i32, i32) {
    %c0_i32 = arith.constant 0 : i32
    %c0_i32_0 = arith.constant 0 : i32
    return %arg0, %c0_i32 : i32, i32
  }
  func.func @transform_1(%arg0: i32) -> (i32, i32) {
    %c0_i32 = arith.constant 0 : i32
    %c0_i32_0 = arith.constant 0 : i32
    return %arg0, %c0_i32 : i32, i32
  }
  func.func @transform_2(%arg0: i32) -> (i32, i32) {
    %c0_i32 = arith.constant 0 : i32
    %c0_i32_0 = arith.constant 0 : i32
    %c0_i32_1 = arith.constant 0 : i32
    return %c0_i32, %c0_i32_0 : i32, i32
  }
  func.func @transform_3(%arg0: i32) -> (i32, i32) {
    %c0_i32 = arith.constant 0 : i32
    %c0_i32_0 = arith.constant 0 : i32
    %c0_i32_1 = arith.constant 0 : i32
    return %c0_i32, %c0_i32_0 : i32, i32
  }
  func.func @transform_4(%arg0: i32) -> (i32, i32) {
    %c0_i32 = arith.constant 0 : i32
    %c0_i32_0 = arith.constant 0 : i32
    %c0_i32_1 = arith.constant 0 : i32
    return %c0_i32, %c0_i32_0 : i32, i32
  }
  func.func @transform_5(%arg0: i32) -> (i32, i32) {
    %c0_i32 = arith.constant 0 : i32
    %c0_i32_0 = arith.constant 0 : i32
    %c0_i32_1 = arith.constant 0 : i32
    return %c0_i32, %c0_i32_0 : i32, i32
  }
  func.func @transform_6(%arg0: i32) -> (i32, i32) {
    %c0_i32 = arith.constant 0 : i32
    %c0_i32_0 = arith.constant 0 : i32
    %c0_i32_1 = arith.constant 0 : i32
    return %c0_i32, %c0_i32_0 : i32, i32
  }
  func.func @transform_7(%arg0: i32) -> (i32, i32) {
    %c0_i32 = arith.constant 0 : i32
    %c0_i32_0 = arith.constant 0 : i32
    return %arg0, %c0_i32 : i32, i32
  }
}

</mosaic_0001>

<llo_original>
// kernel: tpu_custom_call.1
$region0: #{tpu_custom_call.1}
  #allocation0 [shape = 'u32[]', space=smem, size = 0x4, offset = 0x4, fixed_abs, tag = 'smem constant byte address 0x4 - core index']
  #allocation1 [shape = 'u32[144,128]{1,0:T(1,128)}', space=vmem, size = 0x12000, scoped, tag = 'internal scratch']
  %s0 = inlined_call_operand.vmem [shape: f32[8,32], index: 0, kind: input, shape index: {}]
  %s1 = inlined_call_operand.vmem [shape: f32[8,32], index: 1, kind: input, shape index: {}]
  %s2 = inlined_call_operand.vmem [shape: bf16[32,128], index: 2, kind: input, shape index: {}]
  %s3 = inlined_call_operand.vmem [shape: bf16[32,128], index: 3, kind: input, shape index: {}]
  %s4 = inlined_call_operand.vmem [shape: f32[1,128], index: 4, kind: input, shape index: {}]
  %s5 = inlined_call_operand.vmem [shape: bf16[128,8], index: 5, kind: input, shape index: {}]
  %s6 = inlined_call_operand.vmem [shape: f32[1,8], index: 6, kind: input, shape index: {}]
  %s7 = inlined_call_operand.hbm [shape: f32[8,8], index: 7, kind: output, shape index: {}]
  %s8 = sld [smem:[#allocation0]]
  $region38: #{tpu_custom_call.1} parent=0
    _
  %s10 = ssub.s32 1, %s8
  %s11 = scalar_select 0, %s10, %s8
  $region1: #{tpu_custom_call.1} parent=0
    #allocation2 [shape = 'u8[4096]{0}', space=vmem, size = 0x1000, scoped, tag = 'output window, operand 0, single buffered']
    #allocation3 [shape = 's32[1]{0}', space=sflag, size = 0x4, scoped, tag = 'scoped memory for tpu_custom_call.1']
    %12 = vsyncpa [#allocation3], 0
    // Predicated region
    $region2: #{tpu_custom_call.1} parent=1 // pred_check
      _
    $region3: #{tpu_custom_call.1} parent=1 // pred_check_branch
      %14 = sbr.rel (0) target = $region5
    $region4: #{tpu_custom_call.1} parent=1 // pred_region
      _
    $region5: #{tpu_custom_call.1} parent=1 // pred_fallthru
      _
    // Predicated region
    $region6: #{tpu_custom_call.1} parent=1 // pred_check
      _
    $region7: #{tpu_custom_call.1} parent=1 // pred_check_branch
      %16 = sbr.rel (0) target = $region9
    $region8: #{tpu_custom_call.1} parent=1 // pred_region
      _
    $region9: #{tpu_custom_call.1} parent=1 // pred_fallthru
      _
    // Predicated region
    $region10: #{tpu_custom_call.1} parent=1 // pred_check
      _
    $region11: #{tpu_custom_call.1} parent=1 // pred_check_branch
      %18 = sbr.rel (0) target = $region13
    $region12: #{tpu_custom_call.1} parent=1 // pred_region
      _
    $region13: #{tpu_custom_call.1} parent=1 // pred_fallthru
      _
    // Predicated region
    $region14: #{tpu_custom_call.1} parent=1 // pred_check
      _
    $region15: #{tpu_custom_call.1} parent=1 // pred_check_branch
      %20 = sbr.rel (0) target = $region17
    $region16: #{tpu_custom_call.1} parent=1 // pred_region
      _
    $region17: #{tpu_custom_call.1} parent=1 // pred_fallthru
      _
    // Predicated region
    $region18: #{tpu_custom_call.1} parent=1 // pred_check
      _
    $region19: #{tpu_custom_call.1} parent=1 // pred_check_branch
      %22 = sbr.rel (0) target = $region21
    $region20: #{tpu_custom_call.1} parent=1 // pred_region
      _
    $region21: #{tpu_custom_call.1} parent=1 // pred_fallthru
      _
    // Predicated region
    $region22: #{tpu_custom_call.1} parent=1 // pred_check
      _
    $region23: #{tpu_custom_call.1} parent=1 // pred_check_branch
      %24 = sbr.rel (0) target = $region25
    $region24: #{tpu_custom_call.1} parent=1 // pred_region
      _
    $region25: #{tpu_custom_call.1} parent=1 // pred_fallthru
      _
    // Predicated region
    $region26: #{tpu_custom_call.1} parent=1 // pred_check
      _
    $region27: #{tpu_custom_call.1} parent=1 // pred_check_branch
      %26 = sbr.rel (0) target = $region29
    $region28: #{tpu_custom_call.1} parent=1 // pred_region
      _
    $region29: #{tpu_custom_call.1} parent=1 // pred_fallthru
      _
    %v28 = vld [vmem:[%s0] sm:$0xff]
    %v29 = vpack.c.bf16 %v28, %v28
    %v30 = vld [vmem:[%s2] sm:$0xf]
    %v31 = vld [vmem:[%s2 + $0x4] sm:$0xf]
    %v32 = vld [vmem:[%s2 + $0x8] sm:$0xf]
    %v33 = vld [vmem:[%s2 + $0xc] sm:$0xf]
    %v34 = vld [vmem:[%s1] sm:$0xff]
    %v35 = vpack.c.bf16 %v34, %v34
    %v36 = vld [vmem:[%s3] sm:$0xf]
    %v37 = vld [vmem:[%s3 + $0x4] sm:$0xf]
    %v38 = vld [vmem:[%s3 + $0x8] sm:$0xf]
    %v39 = vld [vmem:[%s3 + $0xc] sm:$0xf]
    %v44 = vunpack.c.l.b16 %v36
    %v45 = vunpack.c.l.b16 %v37
    %v46 = vunpack.c.l.b16 %v38
    %v47 = vunpack.c.l.b16 %v39
    %v48 = vpack.c.b16 %v45, %v44
    %v49 = vpack.c.b16 %v47, %v46
    %vm52 = vcmask 261120
    %v54 = vsel %vm52, %v35, 0
    %56 = vmatprep.subr.bf16.mxu0 0
    %57 = vmatpush1.bf16.msra.mxu0 %v48
    %58 = vmatprep.subr.bf16.mxu0 0
    %59 = vmatpush1.bf16.msra.mxu0 %v49
    %60 = vmatprep.subr.bf16.mxu0 0
    %61 = vmatpush1.bf16.msra.mxu0 0
    %62 = vmatprep.subr.bf16.mxu0 0
    %63 = vmatpush1.bf16.msra.mxu0 0
    %64 = vmatprep.subr.bf16.mxu0 0
    %65 = vmatpush1.bf16.msra.mxu0 0
    %66 = vmatprep.subr.bf16.mxu0 0
    %67 = vmatpush1.bf16.msra.mxu0 0
    %68 = vmatprep.subr.bf16.mxu0 0
    %69 = vmatpush1.bf16.msra.mxu0 0
    %70 = vmatprep.subr.bf16.mxu0 0
    %71 = vmatpush1.bf16.msra.mxu0 0
    %72 = vmatprep.subr.bf16.mxu0 0
    %73 = vmatpush1.bf16.msra.mxu0 0
    %74 = vmatprep.subr.bf16.mxu0 0
    %75 = vmatpush1.bf16.msra.mxu0 0
    %76 = vmatprep.subr.bf16.mxu0 0
    %77 = vmatpush1.bf16.msra.mxu0 0
    %78 = vmatprep.subr.bf16.mxu0 0
    %79 = vmatpush1.bf16.msra.mxu0 0
    %80 = vmatprep.subr.bf16.mxu0 0
    %81 = vmatpush1.bf16.msra.mxu0 0
    %82 = vmatprep.subr.bf16.mxu0 0
    %83 = vmatpush1.bf16.msra.mxu0 0
    %84 = vmatprep.subr.bf16.mxu0 0
    %85 = vmatpush1.bf16.msra.mxu0 0
    %86 = vmatprep.subr.bf16.mxu0 0
    %87 = vmatpush1.bf16.msra.mxu0 0
    %88 = vmatprep.mubr.bf16.mxu0 0
    %89 = vmatmul.mubr.bf16.gmra.mrb[0].mxu0 %v54
    %v90 = vpop.f32.mrb[0].mxu0
    %v91 = vadd.f32 0.0, %v90
    %v92 = vpop.f32.mrb[0].mxu0
    %v93 = vpop.f32.mrb[0].mxu0
    %v94 = vpop.f32.mrb[0].mxu0
    %95 = vdwg.mxu0
    %v100 = vunpack.c.l.b16 %v30
    %v101 = vunpack.c.l.b16 %v31
    %v102 = vunpack.c.l.b16 %v32
    %v103 = vunpack.c.l.b16 %v33
    %v104 = vpack.c.b16 %v101, %v100
    %v105 = vpack.c.b16 %v103, %v102
    %v109 = vsel %vm52, %v29, 0
    %111 = vmatprep.subr.bf16.mxu0 0
    %112 = vmatpush1.bf16.msra.mxu0 %v104
    %113 = vmatprep.subr.bf16.mxu0 0
    %114 = vmatpush1.bf16.msra.mxu0 %v105
    %115 = vmatprep.subr.bf16.mxu0 0
    %116 = vmatpush1.bf16.msra.mxu0 0
    %117 = vmatprep.subr.bf16.mxu0 0
    %118 = vmatpush1.bf16.msra.mxu0 0
    %119 = vmatprep.subr.bf16.mxu0 0
    %120 = vmatpush1.bf16.msra.mxu0 0
    %121 = vmatprep.subr.bf16.mxu0 0
    %122 = vmatpush1.bf16.msra.mxu0 0
    %123 = vmatprep.subr.bf16.mxu0 0
    %124 = vmatpush1.bf16.msra.mxu0 0
    %125 = vmatprep.subr.bf16.mxu0 0
    %126 = vmatpush1.bf16.msra.mxu0 0
    %127 = vmatprep.subr.bf16.mxu0 0
    %128 = vmatpush1.bf16.msra.mxu0 0
    %129 = vmatprep.subr.bf16.mxu0 0
    %130 = vmatpush1.bf16.msra.mxu0 0
    %131 = vmatprep.subr.bf16.mxu0 0
    %132 = vmatpush1.bf16.msra.mxu0 0
    %133 = vmatprep.subr.bf16.mxu0 0
    %134 = vmatpush1.bf16.msra.mxu0 0
    %135 = vmatprep.subr.bf16.mxu0 0
    %136 = vmatpush1.bf16.msra.mxu0 0
    %137 = vmatprep.subr.bf16.mxu0 0
    %138 = vmatpush1.bf16.msra.mxu0 0
    %139 = vmatprep.subr.bf16.mxu0 0
    %140 = vmatpush1.bf16.msra.mxu0 0
    %141 = vmatprep.subr.bf16.mxu0 0
    %142 = vmatpush1.bf16.msra.mxu0 0
    %143 = vmatprep.mubr.bf16.mxu0 0
    %144 = vmatmul.mubr.bf16.gmra.mrb[0].mxu0 %v109
    %v145 = vpop.f32.mrb[0].mxu0
    %v146 = vadd.f32 %v91, %v145
    %v147 = vpop.f32.mrb[0].mxu0
    %v148 = vpop.f32.mrb[0].mxu0
    %v149 = vpop.f32.mrb[0].mxu0
    %150 = vdwg.mxu0
    %v151 = vld [vmem:[%s4] sm:$0x1]
    %v153 = vlaneseq
    %v154 = vshrl.u32 %v153, 7
    %v155 = vsub.s32 0, %v154
    %v156 = vrot.slane %v151, %v155
    %v158 = vadd.f32 %v146, %v156
    %v159 = vmax.f32 %v158, 0.0
    %v160 = vpack.c.bf16 %v159, %v159
    %v161 = vld [vmem:[%s5] sm:$0xf]
    %v162 = vld [vmem:[%s5 + $0x4] sm:$0xf]
    %v163 = vld [vmem:[%s5 + $0x8] sm:$0xf]
    %v164 = vld [vmem:[%s5 + $0xc] sm:$0xf]
    %v165 = vld [vmem:[%s5 + $0x10] sm:$0xf]
    %v166 = vld [vmem:[%s5 + $0x14] sm:$0xf]
    %v167 = vld [vmem:[%s5 + $0x18] sm:$0xf]
    %v168 = vld [vmem:[%s5 + $0x1c] sm:$0xf]
    %v169 = vld [vmem:[%s5 + $0x20] sm:$0xf]
    %v170 = vld [vmem:[%s5 + $0x24] sm:$0xf]
    %v171 = vld [vmem:[%s5 + $0x28] sm:$0xf]
    %v172 = vld [vmem:[%s5 + $0x2c] sm:$0xf]
    %v173 = vld [vmem:[%s5 + $0x30] sm:$0xf]
    %v174 = vld [vmem:[%s5 + $0x34] sm:$0xf]
    %v175 = vld [vmem:[%s5 + $0x38] sm:$0xf]
    %v176 = vld [vmem:[%s5 + $0x3c] sm:$0xf]
    %v177 = vld [vmem:[%s6] sm:$0x1]
    %v179 = vlaneseq
    %v180 = vshrl.u32 %v179, 7
    %v181 = vsub.s32 0, %v180
    %v182 = vrot.slane %v177, %v181
    %v200 = vunpack.c.l.b16 %v161
    %v201 = vunpack.c.l.b16 %v162
    %v202 = vunpack.c.l.b16 %v163
    %v203 = vunpack.c.l.b16 %v164
    %v204 = vunpack.c.l.b16 %v165
    %v205 = vunpack.c.l.b16 %v166
    %v206 = vunpack.c.l.b16 %v167
    %v207 = vunpack.c.l.b16 %v168
    %v208 = vunpack.c.l.b16 %v169
    %v209 = vunpack.c.l.b16 %v170
    %v210 = vunpack.c.l.b16 %v171
    %v211 = vunpack.c.l.b16 %v172
    %v212 = vunpack.c.l.b16 %v173
    %v213 = vunpack.c.l.b16 %v174
    %v214 = vunpack.c.l.b16 %v175
    %v215 = vunpack.c.l.b16 %v176
    %v216 = vpack.c.b16 %v201, %v200
    %v217 = vpack.c.b16 %v203, %v202
    %v218 = vpack.c.b16 %v205, %v204
    %v219 = vpack.c.b16 %v207, %v206
    %v220 = vpack.c.b16 %v209, %v208
    %v221 = vpack.c.b16 %v211, %v210
    %v222 = vpack.c.b16 %v213, %v212
    %v223 = vpack.c.b16 %v215, %v214
    %232 = vmatprep.subr.bf16.mxu0 0
    %233 = vmatpush1.bf16.msra.mxu0 %v216
    %234 = vmatprep.subr.bf16.mxu0 0
    %235 = vmatpush1.bf16.msra.mxu0 %v217
    %236 = vmatprep.subr.bf16.mxu0 0
    %237 = vmatpush1.bf16.msra.mxu0 %v218
    %238 = vmatprep.subr.bf16.mxu0 0
    %239 = vmatpush1.bf16.msra.mxu0 %v219
    %240 = vmatprep.subr.bf16.mxu0 0
    %241 = vmatpush1.bf16.msra.mxu0 %v220
    %242 = vmatprep.subr.bf16.mxu0 0
    %243 = vmatpush1.bf16.msra.mxu0 %v221
    %244 = vmatprep.subr.bf16.mxu0 0
    %245 = vmatpush1.bf16.msra.mxu0 %v222
    %246 = vmatprep.subr.bf16.mxu0 0
    %247 = vmatpush1.bf16.msra.mxu0 %v223
    %248 = vmatprep.subr.bf16.mxu0 0
    %249 = vmatpush1.bf16.msra.mxu0 0
    %250 = vmatprep.subr.bf16.mxu0 0
    %251 = vmatpush1.bf16.msra.mxu0 0
    %252 = vmatprep.subr.bf16.mxu0 0
    %253 = vmatpush1.bf16.msra.mxu0 0
    %254 = vmatprep.subr.bf16.mxu0 0
    %255 = vmatpush1.bf16.msra.mxu0 0
    %256 = vmatprep.subr.bf16.mxu0 0
    %257 = vmatpush1.bf16.msra.mxu0 0
    %258 = vmatprep.subr.bf16.mxu0 0
    %259 = vmatpush1.bf16.msra.mxu0 0
    %260 = vmatprep.subr.bf16.mxu0 0
    %261 = vmatpush1.bf16.msra.mxu0 0
    %262 = vmatprep.subr.bf16.mxu0 0
    %263 = vmatpush1.bf16.msra.mxu0 0
    %264 = vmatprep.mubr.bf16.mxu0 0
    %265 = vmatmul.mubr.bf16.gmra.mrb[0].mxu0 %v160
    %v266 = vpop.f32.mrb[0].mxu0
    %v267 = vadd.f32 %v182, %v266
    %v268 = vpop.f32.mrb[0].mxu0
    %v269 = vpop.f32.mrb[0].mxu0
    %v270 = vpop.f32.mrb[0].mxu0
    %271 = vdwg.mxu0
    %vm272 = vcmask 64512
    %273 = vst.msk [vmem:[#allocation2] sm:$0xff] %vm272, %v267
    // Predicated region
    $region30: #{tpu_custom_call.1} parent=1 // pred_check
      _
    $region31: #{tpu_custom_call.1} parent=1 // pred_check_branch
      %275 = sbr.rel (0) target = $region33
    $region32: #{tpu_custom_call.1} parent=1 // pred_region
      %s277 = ssub.s32 128, 128
      %278 = vsyncadd [#allocation3], %s277
      %s280 = sshll.u32 [#allocation2], 4
      %s281 = int_to_ptr.vmem [resolvable:$true] %s280
      %283 = dma.vmem_to_hbm [thread:$0]  %s281, 128, %s7, [#allocation3]
    $region33: #{tpu_custom_call.1} parent=1 // pred_fallthru
      _
    // Predicated region
    $region34: #{tpu_custom_call.1} parent=1 // pred_check
      _
    $region35: #{tpu_custom_call.1} parent=1 // pred_check_branch
      %285 = sbr.rel (0) target = $region37
    $region36: #{tpu_custom_call.1} parent=1 // pred_region
      %286 = dma.done [#allocation3], 128
    $region37: #{tpu_custom_call.1} parent=1 // pred_fallthru
      _
    %287 = vsyncpa [#allocation3], 1

</llo_original>
